<compile_context>
chip_gen: v7x
topology: tpu7x:2x2x1
jax: 0.10.0
libtpu: 0.0.40
codegen_flags: <defaults>
</compile_context>

<pallas_src>
import functools

import jax
import jax.numpy as jnp
from jax import lax
from jax.experimental import pallas as pl
from jax.experimental.pallas import tpu as pltpu


# --------------------------- helpers ------------------------------------------

def _pick_tile(dim, preferred):
    """Largest 'nice' tile that divides `dim`; fall back to the full dim."""
    for t in (preferred, 1024, 512, 256, 128):
        if t <= dim and dim % t == 0:
            return t
    return dim


def _maybe_vmem_limit(bytes_needed):
    """Raise scoped-VMEM limit only when the working set exceeds the v5e default.

    Never lowers below the v6e/v7x default (32 MiB) and caps at 64 MiB so the
    request stays within v7x's physical per-core VMEM.
    """
    if bytes_needed <= 14 * 1024 * 1024:
        return None
    return min(max(int(bytes_needed * 1.25) + (2 << 20), 32 << 20), 64 << 20)


def _gelu(y):
    # TODO(synk): HF BERT default is erf-based GELU; erf lowering in Mosaic is
    # not guaranteed, so we use the tanh approximation (~1e-3 difference).
    c = 0.7978845608028654  # sqrt(2/pi)
    return 0.5 * y * (1.0 + jnp.tanh(c * (y + 0.044715 * y * y * y)))


def _epilogue(y, activation, fuse_ln, ln_refs, ln_eps, out_activation):
    if activation == "gelu":
        y = _gelu(y)
    elif activation == "relu":
        y = jnp.maximum(y, 0.0)
    if fuse_ln:
        res_ref, g_ref, beta_ref = ln_refs
        z = y + res_ref[...].astype(jnp.float32)
        mean = jnp.mean(z, axis=-1, keepdims=True)
        d = z - mean
        var = jnp.mean(d * d, axis=-1, keepdims=True)
        y = (d * lax.rsqrt(var + ln_eps) * g_ref[...].astype(jnp.float32)
             + beta_ref[...].astype(jnp.float32))
    if out_activation == "relu":
        y = jnp.maximum(y, 0.0)
    return y


# --------------------------- linear (+bias, +act, +add&LN) --------------------

def _linear_1pass_kernel(x_ref, w_ref, b_ref, *rest, activation, fuse_ln,
                         ln_eps, out_activation):
    """Single-pass contraction: full K in one MXU sweep, no acc scratch."""
    if fuse_ln:
        res_ref, g_ref, beta_ref, o_ref = rest
        ln_refs = (res_ref, g_ref, beta_ref)
    else:
        (o_ref,) = rest
        ln_refs = None
    y = jnp.dot(x_ref[...], w_ref[...], preferred_element_type=jnp.float32)
    y = y + b_ref[...].astype(jnp.float32)
    y = _epilogue(y, activation, fuse_ln, ln_refs, ln_eps, out_activation)
    o_ref[...] = y.astype(o_ref.dtype)


def _linear_acc_kernel(x_ref, w_ref, b_ref, *rest, activation, fuse_ln,
                       ln_eps, out_activation, n_k):
    """Fallback K-tiled path with f32 VMEM accumulator (very large K only)."""
    if fuse_ln:
        res_ref, g_ref, beta_ref, o_ref, acc_ref = rest
        ln_refs = (res_ref, g_ref, beta_ref)
    else:
        o_ref, acc_ref = rest
        ln_refs = None

    k = pl.program_id(2)

    @pl.when(k == 0)
    def _():
        acc_ref[...] = jnp.zeros_like(acc_ref)

    acc_ref[...] += jnp.dot(x_ref[...], w_ref[...],
                            preferred_element_type=jnp.float32)

    @pl.when(k == n_k - 1)
    def _():
        y = acc_ref[...] + b_ref[...].astype(jnp.float32)
        y = _epilogue(y, activation, fuse_ln, ln_refs, ln_eps, out_activation)
        o_ref[...] = y.astype(o_ref.dtype)


def linear(x, w, b, *, activation="none", residual=None, ln_gamma=None,
           ln_beta=None, ln_eps=1e-12, out_activation="none", out_dtype=None,
           tm=512, tn=512, tk=512):
    """y = act(x @ w + b); optionally fused  LN(residual + y)  epilogue."""
    M, K = x.shape
    N = w.shape[1]
    out_dtype = out_dtype or x.dtype
    fuse_ln = ln_gamma is not None

    tm = _pick_tile(M, tm)
    # LayerNorm needs the full row in one output block.
    tn = N if fuse_ln else _pick_tile(N, tn)

    xb = jnp.dtype(x.dtype).itemsize
    wb = jnp.dtype(w.dtype).itemsize
    ob = jnp.dtype(out_dtype).itemsize

    # Single-pass contraction when the (K, tn) weight panel is modest: removes
    # the acc RMW traffic on the store slot and 2/3 of the grid steps.  All
    # BERT-base GEMMs (K <= 3072) hit this path.
    single_k = K * tn * wb <= 12 * 1024 * 1024
    tk = K if single_k else _pick_tile(K, tk)
    n_k = K // tk

    args = [x, w, b.reshape(1, N)]

    # Rough double-buffered VMEM budget for this call.
    blk_bytes = 2 * (tm * tk * xb + tk * tn * wb + tn * wb) + 2 * tm * tn * ob
    if fuse_ln:
        blk_bytes += 2 * (tm * tn * xb + 2 * tn * wb)
    if not single_k:
        blk_bytes += tm * tn * 4
    vmem_limit = _maybe_vmem_limit(blk_bytes)

    if single_k:
        in_specs = [
            pl.BlockSpec((tm, K), lambda i, j: (i, 0)),
            pl.BlockSpec((K, tn), lambda i, j: (0, j)),
            pl.BlockSpec((1, tn), lambda i, j: (0, j)),
        ]
        if fuse_ln:
            # TODO(synk): on v7x, single-buffering (pl.Buffered(1)) these
            # epilogue-only operands would free ~2 MiB of scoped VMEM.
            in_specs += [
                pl.BlockSpec((tm, tn), lambda i, j: (i, j)),   # residual
                pl.BlockSpec((1, tn), lambda i, j: (0, j)),    # gamma
                pl.BlockSpec((1, tn), lambda i, j: (0, j)),    # beta
            ]
            args += [residual, ln_gamma.reshape(1, N), ln_beta.reshape(1, N)]
        grid = (M // tm, N // tn)
        out_spec = pl.BlockSpec((tm, tn), lambda i, j: (i, j))
        scratch = []
        kernel = functools.partial(
            _linear_1pass_kernel, activation=activation, fuse_ln=fuse_ln,
            ln_eps=ln_eps, out_activation=out_activation)
        dims = ("parallel", "parallel")
    else:
        in_specs = [
            pl.BlockSpec((tm, tk), lambda i, j, k: (i, k)),
            pl.BlockSpec((tk, tn), lambda i, j, k: (k, j)),
            pl.BlockSpec((1, tn), lambda i, j, k: (0, j)),
        ]
        if fuse_ln:
            in_specs += [
                pl.BlockSpec((tm, tn), lambda i, j, k: (i, j)),   # residual
                pl.BlockSpec((1, tn), lambda i, j, k: (0, j)),    # gamma
                pl.BlockSpec((1, tn), lambda i, j, k: (0, j)),    # beta
            ]
            args += [residual, ln_gamma.reshape(1, N), ln_beta.reshape(1, N)]
        grid = (M // tm, N // tn, n_k)
        out_spec = pl.BlockSpec((tm, tn), lambda i, j, k: (i, j))
        scratch = [pltpu.VMEM((tm, tn), jnp.float32)]
        kernel = functools.partial(
            _linear_acc_kernel, activation=activation, fuse_ln=fuse_ln,
            ln_eps=ln_eps, out_activation=out_activation, n_k=n_k)
        dims = ("parallel", "parallel", "arbitrary")

    return pl.pallas_call(
        kernel,
        out_shape=jax.ShapeDtypeStruct((M, N), out_dtype),
        grid=grid,
        in_specs=in_specs,
        out_specs=out_spec,
        scratch_shapes=scratch,
        compiler_params=pltpu.CompilerParams(
            dimension_semantics=dims, vmem_limit_bytes=vmem_limit),
    )(*args)


# --------------------------- LayerNorm (no residual, for embeddings) ----------

def _ln_kernel(x_ref, g_ref, b_ref, o_ref, *, eps):
    x = x_ref[...].astype(jnp.float32)
    mean = jnp.mean(x, axis=-1, keepdims=True)
    d = x - mean
    var = jnp.mean(d * d, axis=-1, keepdims=True)
    y = (d * lax.rsqrt(var + eps) * g_ref[...].astype(jnp.float32)
         + b_ref[...].astype(jnp.float32))
    o_ref[...] = y.astype(o_ref.dtype)


def layernorm(x, gamma, beta, eps=1e-12, tm=512, out_dtype=None):
    M, H = x.shape
    out_dtype = out_dtype or x.dtype
    tm = _pick_tile(M, tm)
    return pl.pallas_call(
        functools.partial(_ln_kernel, eps=eps),
        out_shape=jax.ShapeDtypeStruct((M, H), out_dtype),
        grid=(M // tm,),
        in_specs=[
            pl.BlockSpec((tm, H), lambda i: (i, 0)),
            pl.BlockSpec((1, H), lambda i: (0, 0)),
            pl.BlockSpec((1, H), lambda i: (0, 0)),
        ],
        out_specs=pl.BlockSpec((tm, H), lambda i: (i, 0)),
        compiler_params=pltpu.CompilerParams(
            dimension_semantics=("parallel",)),
    )(x, gamma.reshape(1, H), beta.reshape(1, H))


# --------------------------- attention -----------------------------------------

def _attention_kernel(q_ref, k_ref, v_ref, m_ref, o_ref, *, scale, hpb, dh):
    # 1/sqrt(head_dim) folded into Q once per block (cheap: tq*gsz VPU ops)
    # instead of scaling every element of the (tq, S) score matrices.
    q = q_ref[0] * scale                  # (tq, hpb*dh)
    k = k_ref[0]                          # (S,  hpb*dh)
    v = v_ref[0]
    m = m_ref[0].astype(jnp.float32)      # (1, S) additive mask

    ctx_parts = []
    for h in range(hpb):                  # static unroll over packed heads
        qh = q[:, h * dh:(h + 1) * dh]
        kh = k[:, h * dh:(h + 1) * dh]
        vh = v[:, h * dh:(h + 1) * dh]
        # QK^T via dot_general contracting the last dims -> no explicit .T
        s = lax.dot_general(qh, kh, (((1,), (1,)), ((), ())),
                            preferred_element_type=jnp.float32)
        s = s + m
        s = s - jnp.max(s, axis=-1, keepdims=True)
        # TODO(synk): on v6e/v7x a bf16 exp roughly doubles EUP throughput;
        # kept f32 here for v5e compatibility and bit-closeness.
        p = jnp.exp(s)
        p = p * pl.reciprocal(jnp.sum(p, axis=-1, keepdims=True), approx=True)
        ctx_parts.append(
            jnp.dot(p.astype(vh.dtype), vh, preferred_element_type=jnp.float32))
    o_ref[0] = jnp.concatenate(ctx_parts, axis=-1).astype(o_ref.dtype)


def attention(qkv, ext_mask, *, num_heads, head_dim, tq=256):
    """qkv: (B, S, 3H) fused projection slab, ext_mask: (B, 1, S) additive."""
    B, S, threeH = qkv.shape
    H = threeH // 3
    nH, Dh = num_heads, head_dim

    # Pack heads so the DMA'd lane width is a multiple of 128 when possible.
    hpb = nH
    for cand in range(1, nH + 1):
        if nH % cand == 0 and (cand * Dh) % 128 == 0:
            hpb = cand
            break
    n_groups = nH // hpb
    gsz = hpb * Dh
    scale = 1.0 / (Dh ** 0.5)

    # Query tiling: scores are (tq, S) instead of (S, S), so they stay in
    # vregs / small VMEM at long S.  Keys/values for the block stay fully
    # resident, so the softmax over the key axis remains exact (no online
    # softmax needed for bidirectional BERT attention).
    tq = S if S <= tq else _pick_tile(S, tq)
    n_q = S // tq

    # Flattened (B * n_groups) leading parallel axis -> even megacore split
    # even when B is small/odd.
    def q_map(bg, qi):
        return (bg // n_groups, qi, bg % n_groups)

    def k_map(bg, qi):
        return (bg // n_groups, 0, n_groups + bg % n_groups)

    def v_map(bg, qi):
        return (bg // n_groups, 0, 2 * n_groups + bg % n_groups)

    def m_map(bg, qi):
        return (bg // n_groups, 0, 0)

    return pl.pallas_call(
        functools.partial(_attention_kernel, scale=scale, hpb=hpb, dh=Dh),
        out_shape=jax.ShapeDtypeStruct((B, S, H), qkv.dtype),
        grid=(B * n_groups, n_q),
        in_specs=[
            pl.BlockSpec((1, tq, gsz), q_map),     # Q (query tile)
            pl.BlockSpec((1, S, gsz), k_map),      # K (full sequence)
            pl.BlockSpec((1, S, gsz), v_map),      # V (full sequence)
            pl.BlockSpec((1, 1, S), m_map),        # additive mask
        ],
        out_specs=pl.BlockSpec((1, tq, gsz), q_map),
        compiler_params=pltpu.CompilerParams(
            dimension_semantics=("parallel", "parallel")),
    )(qkv, qkv, qkv, ext_mask)


# --------------------------- fused [CLS] head (last-layer FFN) -----------------

def _cls_head_kernel(x_ref, w1_ref, b1_ref, w2_ref, b2_ref, g_ref, beta_ref,
                     o_ref, *, ln_eps):
    x = x_ref[...]
    h = jnp.dot(x, w1_ref[...], preferred_element_type=jnp.float32)
    h = _gelu(h + b1_ref[...].astype(jnp.float32))
    y = jnp.dot(h.astype(w2_ref.dtype), w2_ref[...],
                preferred_element_type=jnp.float32)
    y = y + b2_ref[...].astype(jnp.float32)
    z = y + x.astype(jnp.float32)
    mean = jnp.mean(z, axis=-1, keepdims=True)
    d = z - mean
    var = jnp.mean(d * d, axis=-1, keepdims=True)
    y = (d * lax.rsqrt(var + ln_eps) * g_ref[...].astype(jnp.float32)
         + beta_ref[...].astype(jnp.float32))
    o_ref[...] = jnp.maximum(y, 0.0).astype(o_ref.dtype)


def cls_head(x, w1, b1, w2, b2, gamma, beta, *, ln_eps=1e-12):
    """ReLU(LN(x + (GELU(x@W1+b1))@W2 + b2)) for the [CLS] rows, one kernel."""
    B, H = x.shape
    I = w1.shape[1]
    wb = jnp.dtype(w1.dtype).itemsize
    vmem_limit = _maybe_vmem_limit(2 * (2 * H * I * wb) + 4 * (B * max(H, I) * 4))
    return pl.pallas_call(
        functools.partial(_cls_head_kernel, ln_eps=ln_eps),
        out_shape=jax.ShapeDtypeStruct((B, H), jnp.float32),
        grid=(1,),
        in_specs=[
            pl.BlockSpec((B, H), lambda i: (0, 0)),
            pl.BlockSpec((H, I), lambda i: (0, 0)),
            pl.BlockSpec((1, I), lambda i: (0, 0)),
            pl.BlockSpec((I, H), lambda i: (0, 0)),
            pl.BlockSpec((1, H), lambda i: (0, 0)),
            pl.BlockSpec((1, H), lambda i: (0, 0)),
            pl.BlockSpec((1, H), lambda i: (0, 0)),
        ],
        out_specs=pl.BlockSpec((B, H), lambda i: (0, 0)),
        compiler_params=pltpu.CompilerParams(
            dimension_semantics=("arbitrary",), vmem_limit_bytes=vmem_limit),
    )(x, w1, b1.reshape(1, I), w2, b2.reshape(1, H),
      gamma.reshape(1, H), beta.reshape(1, H))


# --------------------------- Parameters (synthetic) ----------------------------

def init_params(key, *, vocab_size, hidden, num_layers, intermediate,
                max_pos, type_vocab, dtype=jnp.bfloat16):
    def norm(k, shape):
        return (0.02 * jax.random.normal(k, shape, dtype=jnp.float32)).astype(dtype)

    keys = jax.random.split(key, 3 + num_layers)
    params = {
        "word_emb": norm(keys[0], (vocab_size, hidden)),
        "pos_emb": norm(keys[1], (max_pos, hidden)),
        "type_emb": norm(keys[2], (type_vocab, hidden)),
        "emb_ln_g": jnp.ones((hidden,), dtype),
        "emb_ln_b": jnp.zeros((hidden,), dtype),
        "layers": [],
    }
    for l in range(num_layers):
        lk = jax.random.split(keys[3 + l], 4)
        params["layers"].append({
            # Q/K/V projections pre-fused into a single (H, 3H) weight.
            "w_qkv": norm(lk[0], (hidden, 3 * hidden)),
            "b_qkv": jnp.zeros((3 * hidden,), dtype),
            "wo": norm(lk[1], (hidden, hidden)),
            "bo": jnp.zeros((hidden,), dtype),
            "ln1_g": jnp.ones((hidden,), dtype),
            "ln1_b": jnp.zeros((hidden,), dtype),
            "w1": norm(lk[2], (hidden, intermediate)),
            "b1": jnp.zeros((intermediate,), dtype),
            "w2": norm(lk[3], (intermediate, hidden)),
            "b2": jnp.zeros((hidden,), dtype),
            "ln2_g": jnp.ones((hidden,), dtype),
            "ln2_b": jnp.zeros((hidden,), dtype),
        })
    return params


# --------------------------- PartialBert forward --------------------------------

def partial_bert_forward(params, input_ids, token_type_ids, attention_mask,
                         *, num_heads):
    B, S = input_ids.shape
    H = params["word_emb"].shape[1]
    Dh = H // num_heads
    act_dtype = params["word_emb"].dtype

    # Embeddings (gathers kept in plain-JAX glue), summed in f32, then a
    # no-residual LN kernel emits bf16 activations.
    we = jnp.take(params["word_emb"], input_ids, axis=0)        # (B,S,H)
    pe = params["pos_emb"][:S][None, :, :]                      # (1,S,H)
    te = jnp.take(params["type_emb"], token_type_ids, axis=0)   # (B,S,H)
    emb = (we.astype(jnp.float32) + pe.astype(jnp.float32)
           + te.astype(jnp.float32)).reshape(B * S, H)
    x = layernorm(emb, params["emb_ln_g"], params["emb_ln_b"],
                  out_dtype=act_dtype)

    # Extended additive attention mask, (B, 1, S), as in HF BERT. Kept f32.
    # TODO(synk): attention/hidden dropout omitted (inference/eval mode).
    ext_mask = (1.0 - attention_mask.astype(jnp.float32)) * -10000.0
    ext_mask = ext_mask[:, None, :]

    num_layers = len(params["layers"])
    out = None
    for li, layer in enumerate(params["layers"]):
        last = li == num_layers - 1

        # Fused QKV projection: one HBM read of x, one matmul.
        qkv = linear(x, layer["w_qkv"], layer["b_qkv"])          # (B*S, 3H)
        ctx = attention(qkv.reshape(B, S, 3 * H), ext_mask,
                        num_heads=num_heads, head_dim=Dh)        # (B, S, H)
        ctx = ctx.reshape(B * S, H)

        # Wo projection with fused residual-add + LayerNorm epilogue.
        x = linear(ctx, layer["wo"], layer["bo"],
                   residual=x, ln_gamma=layer["ln1_g"], ln_beta=layer["ln1_b"])

        if last:
            # Only the [CLS] token feeds the output head: single fused kernel
            # for W1 + GELU + W2 + residual + LN2 + final ReLU on (B, H) rows.
            cls = x.reshape(B, S, H)[:, 0, :]
            out = cls_head(cls, layer["w1"], layer["b1"],
                           layer["w2"], layer["b2"],
                           layer["ln2_g"], layer["ln2_b"])
        else:
            # tn=1024 on the FFN-up GEMM halves re-reads of the x slab.
            h = linear(x, layer["w1"], layer["b1"], activation="gelu", tn=1024)
            x = linear(h, layer["w2"], layer["b2"],
                       residual=x, ln_gamma=layer["ln2_g"],
                       ln_beta=layer["ln2_b"])

    return out   # (B, H) float32 == ReLU(bert(...)[0][:, 0, :])


# --------------------------- Demo ------------------------------------------------

if __name__ == "__main__":
    # Small but TPU-friendly shapes: head_dim=64 like real BERT so two heads
    # pack into a 128-lane attention block.
    B, S, H = 2, 8, 128
    NUM_HEADS, NUM_LAYERS, INTERMEDIATE = 2, 2, 512
    VOCAB, MAX_POS, TYPE_VOCAB = 100, 16, 2

    key = jax.random.PRNGKey(0)
    pkey, ikey = jax.random.split(key)

    params = init_params(pkey, vocab_size=VOCAB, hidden=H,
                         num_layers=NUM_LAYERS, intermediate=INTERMEDIATE,
                         max_pos=MAX_POS, type_vocab=TYPE_VOCAB)

    input_ids = jax.random.randint(ikey, (B, S), 0, VOCAB, dtype=jnp.int32)
    token_type_ids = jnp.zeros((B, S), jnp.int32)
    attention_mask = jnp.ones((B, S), jnp.int32)

    out = partial_bert_forward(params, input_ids, token_type_ids,
                               attention_mask, num_heads=NUM_HEADS)
    jax.block_until_ready(out)
    assert out.shape == (B, H) and out.dtype == jnp.float32
    print("KERNEL_OK")
</pallas_src>

<mosaic_0001>
module attributes {stable_mosaic.version = 11 : i64} {
  func.func @_ln_kernel(%arg0: i32, %arg1: memref<16x128xf32, #tpu.memory_space<vmem>>, %arg2: memref<1x128xbf16, #tpu.memory_space<vmem>>, %arg3: memref<1x128xbf16, #tpu.memory_space<vmem>>, %arg4: memref<16x128xbf16, #tpu.memory_space<vmem>>) attributes {dimension_semantics = [#tpu.dimension_semantics<parallel>], iteration_bounds = array<i64: 1>, scalar_prefetch = 0 : i64, scratch_operands = 0 : i64, tpu.core_type = #tpu.core_type<tc>, window_params = [{transform_indices = @transform_0, window_bounds = array<i64: 16, 128>}, {pipeline_mode = #tpu.pipeline_mode<synchronous>, transform_indices = @transform_1, window_bounds = array<i64: 1, 128>}, {pipeline_mode = #tpu.pipeline_mode<synchronous>, transform_indices = @transform_2, window_bounds = array<i64: 1, 128>}, {transform_indices = @transform_3, window_bounds = array<i64: 16, 128>}]} {
    %c0 = arith.constant 0 : index
    %c0_0 = arith.constant 0 : index
    %0 = vector.load %arg1[%c0, %c0_0] : memref<16x128xf32, #tpu.memory_space<vmem>>, vector<16x128xf32>
    %cst = arith.constant dense<0.000000e+00> : vector<16xf32>
    %1 = vector.multi_reduction <add>, %0, %cst [1] : vector<16x128xf32> to vector<16xf32>
    %2 = vector.shape_cast %1 : vector<16xf32> to vector<16x1xf32>
    %cst_1 = arith.constant 1.280000e+02 : f32
    %3 = vector.broadcast %cst_1 : f32 to vector<16x1xf32>
    %4 = arith.divf %2, %3 : vector<16x1xf32>
    %5 = vector.broadcast %4 : vector<16x1xf32> to vector<16x128xf32>
    %6 = arith.subf %0, %5 : vector<16x128xf32>
    %7 = arith.mulf %6, %6 : vector<16x128xf32>
    %cst_2 = arith.constant dense<0.000000e+00> : vector<16xf32>
    %8 = vector.multi_reduction <add>, %7, %cst_2 [1] : vector<16x128xf32> to vector<16xf32>
    %9 = vector.shape_cast %8 : vector<16xf32> to vector<16x1xf32>
    %cst_3 = arith.constant 1.280000e+02 : f32
    %10 = vector.broadcast %cst_3 : f32 to vector<16x1xf32>
    %11 = arith.divf %9, %10 : vector<16x1xf32>
    %cst_4 = arith.constant 9.99999996E-13 : f32
    %12 = vector.broadcast %cst_4 : f32 to vector<16x1xf32>
    %13 = arith.addf %11, %12 : vector<16x1xf32>
    %14 = math.rsqrt %13 : vector<16x1xf32>
    %15 = vector.broadcast %14 : vector<16x1xf32> to vector<16x128xf32>
    %16 = arith.mulf %6, %15 : vector<16x128xf32>
    %c0_5 = arith.constant 0 : index
    %c0_6 = arith.constant 0 : index
    %17 = vector.load %arg2[%c0_5, %c0_6] : memref<1x128xbf16, #tpu.memory_space<vmem>>, vector<1x128xbf16>
    %18 = arith.extf %17 : vector<1x128xbf16> to vector<1x128xf32>
    %19 = vector.broadcast %18 : vector<1x128xf32> to vector<16x128xf32>
    %20 = arith.mulf %16, %19 : vector<16x128xf32>
    %c0_7 = arith.constant 0 : index
    %c0_8 = arith.constant 0 : index
    %21 = vector.load %arg3[%c0_7, %c0_8] : memref<1x128xbf16, #tpu.memory_space<vmem>>, vector<1x128xbf16>
    %22 = arith.extf %21 : vector<1x128xbf16> to vector<1x128xf32>
    %23 = vector.broadcast %22 : vector<1x128xf32> to vector<16x128xf32>
    %24 = arith.addf %20, %23 : vector<16x128xf32>
    %25 = arith.truncf %24 : vector<16x128xf32> to vector<16x128xbf16>
    %c0_9 = arith.constant 0 : index
    %c0_10 = arith.constant 0 : index
    %26 = vector.load %arg4[%c0_9, %c0_10] : memref<16x128xbf16, #tpu.memory_space<vmem>>, vector<16x128xbf16>
    tpu.vector_store %arg4[%c0_9, %c0_10], %25 {strides = array<i32>} : memref<16x128xbf16, #tpu.memory_space<vmem>>, vector<16x128xbf16>,
    return
  }
  func.func @transform_0(%arg0: i32) -> (i32, i32) {
    %c0_i32 = arith.constant 0 : i32
    %c0_i32_0 = arith.constant 0 : i32
    return %arg0, %c0_i32 : i32, i32
  }
  func.func @transform_1(%arg0: i32) -> (i32, i32) {
    %c0_i32 = arith.constant 0 : i32
    %c0_i32_0 = arith.constant 0 : i32
    %c0_i32_1 = arith.constant 0 : i32
    return %c0_i32, %c0_i32_0 : i32, i32
  }
  func.func @transform_2(%arg0: i32) -> (i32, i32) {
    %c0_i32 = arith.constant 0 : i32
    %c0_i32_0 = arith.constant 0 : i32
    %c0_i32_1 = arith.constant 0 : i32
    return %c0_i32, %c0_i32_0 : i32, i32
  }
  func.func @transform_3(%arg0: i32) -> (i32, i32) {
    %c0_i32 = arith.constant 0 : i32
    %c0_i32_0 = arith.constant 0 : i32
    return %arg0, %c0_i32 : i32, i32
  }
}

</mosaic_0001>

<llo_original>
// kernel: tpu_custom_call.1
$region0: #{tpu_custom_call.1}
  #allocation0 [shape = 'u32[]', space=smem, size = 0x4, offset = 0x4, fixed_abs, tag = 'smem constant byte address 0x4 - core index']
  #allocation1 [shape = 'u32[144,128]{1,0:T(1,128)}', space=vmem, size = 0x12000, scoped, tag = 'internal scratch']
  %s0 = inlined_call_operand.hbm [shape: f32[16,128], index: 0, kind: input, shape index: {}]
  %s1 = inlined_call_operand.vmem [shape: bf16[1,128], index: 1, kind: input, shape index: {}]
  %s2 = inlined_call_operand.vmem [shape: bf16[1,128], index: 2, kind: input, shape index: {}]
  %s3 = inlined_call_operand.hbm [shape: bf16[16,128], index: 3, kind: output, shape index: {}]
  %s4 = sld [smem:[#allocation0]]
  $region26: #{tpu_custom_call.1} parent=0
    _
  %s6 = ssub.s32 1, %s4
  %s7 = scalar_select 0, %s6, %s4
  $region1: #{tpu_custom_call.1} parent=0
    #allocation2 [shape = 'u8[8192]{0}', space=vmem, size = 0x2000, scoped, tag = 'input window, operand 0, single buffered']
    #allocation3 [shape = 's32[1]{0}', space=sflag, size = 0x4, scoped, tag = 'scoped memory for tpu_custom_call.1']
    #allocation4 [shape = 's32[1]{0}', space=sflag, size = 0x4, scoped, tag = 'scoped memory for tpu_custom_call.1']
    #allocation5 [shape = 'u8[4096]{0}', space=vmem, size = 0x1000, scoped, tag = 'output window, operand 0, single buffered']
    %8 = vsyncpa [#allocation3], 0
    %9 = vsyncpa [#allocation4], 0
    // Predicated region
    $region2: #{tpu_custom_call.1} parent=1 // pred_check
      _
    $region3: #{tpu_custom_call.1} parent=1 // pred_check_branch
      %11 = sbr.rel (0) target = $region5
    $region4: #{tpu_custom_call.1} parent=1 // pred_region
      %s13 = ssub.s32 256, 256
      %14 = vsyncadd [#allocation3], %s13
      %s15 = sshll.u32 [#allocation2], 4
      %s16 = int_to_ptr.vmem [resolvable:$true] %s15
      %21 = dma.hbm_to_vmem [thread:$0]  %s0, 256, %s16, [#allocation3], 128, 128, 8
    $region5: #{tpu_custom_call.1} parent=1 // pred_fallthru
      _
    // Predicated region
    $region6: #{tpu_custom_call.1} parent=1 // pred_check
      _
    $region7: #{tpu_custom_call.1} parent=1 // pred_check_branch
      %23 = sbr.rel (0) target = $region9
    $region8: #{tpu_custom_call.1} parent=1 // pred_region
      _
    $region9: #{tpu_custom_call.1} parent=1 // pred_fallthru
      _
    // Predicated region
    $region10: #{tpu_custom_call.1} parent=1 // pred_check
      _
    $region11: #{tpu_custom_call.1} parent=1 // pred_check_branch
      %25 = sbr.rel (0) target = $region13
    $region12: #{tpu_custom_call.1} parent=1 // pred_region
      _
    $region13: #{tpu_custom_call.1} parent=1 // pred_fallthru
      _
    // Predicated region
    $region14: #{tpu_custom_call.1} parent=1 // pred_check
      _
    $region15: #{tpu_custom_call.1} parent=1 // pred_check_branch
      %27 = sbr.rel (0) target = $region17
    $region16: #{tpu_custom_call.1} parent=1 // pred_region
      %28 = dma.done [#allocation3], 256
    $region17: #{tpu_custom_call.1} parent=1 // pred_fallthru
      _
    %v29 = vld [vmem:[#allocation2] sm:$0xff]
    %v30 = vld [vmem:[#allocation2 + $0x8] sm:$0xff]
    %31 = vadd.xlane.f32.xlu0 %v29
    %v32 = vpop.xlane.xlu0 %31
    %33 = vadd.xlane.f32.xlu0 %v30
    %v34 = vpop.xlane.xlu0 %33
    %v35 = vrcp.pop 128.0
    %v36 = vmul.f32 %v32, %v35
    %v37 = vmul.f32 %v34, %v35
    %v38 = vsub.f32 %v29, %v36
    %v39 = vsub.f32 %v30, %v37
    %v40 = vmul.f32 %v38, %v38
    %v41 = vmul.f32 %v39, %v39
    %42 = vadd.xlane.f32.xlu0 %v40
    %v43 = vpop.xlane.xlu0 %42
    %44 = vadd.xlane.f32.xlu0 %v41
    %v45 = vpop.xlane.xlu0 %44
    %v46 = vmul.f32 %v43, %v35
    %v47 = vmul.f32 %v45, %v35
    %v48 = vadd.f32 %v46, 1e-12
    %v49 = vadd.f32 %v47, 1e-12
    %v50 = vrsqrt.pop %v48
    %v51 = vrsqrt.pop %v49
    %v52 = vmul.f32 %v38, %v50
    %v53 = vmul.f32 %v39, %v51
    %v54 = vld [vmem:[%s1] sm:$0x1]
    %v55 = vunpack.c.l.bf16 %v54
    %v56 = vlaneseq
    %v57 = vshrl.u32 %v56, 7
    %v58 = vsub.s32 0, %v57
    %v59 = vrot.slane %v55, %v58
    %v60 = vmul.f32 %v52, %v59
    %v61 = vmul.f32 %v53, %v59
    %v62 = vld [vmem:[%s2] sm:$0x1]
    %v63 = vunpack.c.l.bf16 %v62
    %v64 = vlaneseq
    %v65 = vshrl.u32 %v64, 7
    %v66 = vsub.s32 0, %v65
    %v67 = vrot.slane %v63, %v66
    %v68 = vadd.f32 %v60, %v67
    %v69 = vadd.f32 %v61, %v67
    %v70 = vpack.c.bf16 %v69, %v68
    %v72 = vunpack.c.l.b16 %v70
    %v73 = vunpack.c.h.b16 %v70
    %v74 = vpack.c.b16 %v72, %v72
    %v75 = vpack.c.b16 %v73, %v73
    %78 = vst [vmem:[#allocation5] sm:$0xf] %v74
    %79 = vst [vmem:[#allocation5 + $0x4] sm:$0xf] %v75
    // Predicated region
    $region18: #{tpu_custom_call.1} parent=1 // pred_check
      _
    $region19: #{tpu_custom_call.1} parent=1 // pred_check_branch
      %81 = sbr.rel (0) target = $region21
    $region20: #{tpu_custom_call.1} parent=1 // pred_region
      %s83 = ssub.s32 128, 128
      %84 = vsyncadd [#allocation4], %s83
      %s85 = sshll.u32 [#allocation5], 4
      %s86 = int_to_ptr.vmem [resolvable:$true] %s85
      %91 = dma.vmem_to_hbm [thread:$0]  %s86, 128, %s3, [#allocation4], 64, 64, 4
    $region21: #{tpu_custom_call.1} parent=1 // pred_fallthru
      _
    // Predicated region
    $region22: #{tpu_custom_call.1} parent=1 // pred_check
      _
    $region23: #{tpu_custom_call.1} parent=1 // pred_check_branch
      %93 = sbr.rel (0) target = $region25
    $region24: #{tpu_custom_call.1} parent=1 // pred_region
      %94 = dma.done [#allocation4], 128
    $region25: #{tpu_custom_call.1} parent=1 // pred_fallthru
      _
    %95 = vsyncpa [#allocation3], 1
    %96 = vsyncpa [#allocation4], 1

</llo_original>
